<compile_context>
chip_gen: v7x
topology: tpu7x:2x2x1
jax: 0.10.0
libtpu: 0.0.40
codegen_flags: <defaults>
</compile_context>

<pallas_src>
import math

import jax
import jax.numpy as jnp
from jax.experimental import pallas as pl
from jax.experimental.pallas import tpu as pltpu


def _build_pe_table(d_model: int, max_len: int) -> jnp.ndarray:
    """Deterministic buffer from __init__ (sin on even dims, cos on odd dims)."""
    position = jnp.arange(0, max_len, dtype=jnp.float32)[:, None]             # (L, 1)
    div_term = jnp.exp(jnp.arange(0, d_model, 2, dtype=jnp.float32)
                       * (-math.log(10000.0) / d_model))                      # (D/2,)
    ang = position * div_term                                                 # (L, D/2)
    pe = jnp.zeros((max_len, d_model), dtype=jnp.float32)
    pe = pe.at[:, 0::2].set(jnp.sin(ang))
    pe = pe.at[:, 1::2].set(jnp.cos(ang))
    return pe                                                                 # (L, D)


def prepare_pe_rows(pe_full: jnp.ndarray, seq_len: int, d_model: int,
                    dtype) -> jnp.ndarray:
    """Hoist slice/reshape/cast out of the per-call path (cache this at init).

    Note: pe is cast to the activation dtype once (standard practice; halves pe
    bytes for bf16 activations).  The PyTorch module adds the fp32 buffer and
    relies on promotion — identical for fp32 activations.
    """
    return pe_full[:seq_len, :d_model].reshape(1, seq_len * d_model).astype(dtype)


def _add_pe_kernel(x_ref, pe_ref, o_ref):
    # x block: (tb, tc); pe block: (1, tc) -> sublane broadcast; pure VPU add.
    o_ref[...] = (x_ref[...] + pe_ref[...]).astype(o_ref.dtype)


def _choose_tiles(batch: int, row: int, itemsize: int,
                  target_tile_bytes: int = 2 << 20):
    """Pick (tb, tc) for the flattened (B, S*D) view.

    ~2 MiB per x/out tile: >=512 lanes wide (near the HBM roofline on all three
    generations) while keeping the double-buffered footprint far under v5e's
    16 MiB scoped VMEM.  Ragged boundaries are handled by pl.cdiv grids, so no
    exact-divisor search is needed.
    """
    sub = {4: 8, 2: 16, 1: 32}.get(itemsize, 8)          # sublane tile per dtype

    # Column (lane) tile: largest multiple of 128 such that a (sub, tc) tile
    # is ~target_tile_bytes; never the whole row unless the whole row fits.
    tc_cap = max(128, ((target_tile_bytes // (sub * itemsize)) // 128) * 128)
    tc = min(row, tc_cap)

    if tc < row:
        # Column-split: keep the second-minor dim a full sublane tile (never 1).
        tb = min(batch, sub)
    else:
        # Whole rows fit in a tile: stack rows up to ~target_tile_bytes.
        rows = max(sub, ((target_tile_bytes // max(1, row * itemsize)) // sub) * sub)
        tb = min(batch, rows)
    return tb, tc


def positional_encoding_forward_prepared(x: jnp.ndarray, pe_row: jnp.ndarray,
                                         *, force_pallas: bool = False,
                                         min_pallas_bytes: int = 1 << 20) -> jnp.ndarray:
    """x: (B, S, D); pe_row: (1, S*D) already sliced/cast (see prepare_pe_rows)."""
    B, S, D = x.shape
    row = S * D
    assert pe_row.shape == (1, row)
    itemsize = jnp.dtype(x.dtype).itemsize

    # Tiny inputs: a Pallas call is pure fixed overhead; let XLA fuse the add.
    if (not force_pallas) and B * row * itemsize < min_pallas_bytes:
        return x + pe_row.reshape(1, S, D).astype(x.dtype)

    x2 = x.reshape(B, row)                                 # lane-dense 2D view
    tb, tc = _choose_tiles(B, row, itemsize)
    n_col = pl.cdiv(row, tc)
    n_row = pl.cdiv(B, tb)

    # Explicit VMEM budget from the chosen tiles (x, out, pe; double-buffered).
    tile_bytes = tb * tc * itemsize
    pe_bytes = tc * itemsize
    needed = 2 * (2 * tile_bytes + pe_bytes)
    vmem_limit = int(min(max(2 * needed, 16 << 20), 32 << 20))

    out2 = pl.pallas_call(
        _add_pe_kernel,
        out_shape=jax.ShapeDtypeStruct((B, row), x.dtype),
        # Column axis OUTER, batch axis INNER: the pe block index (0, j) is
        # constant across consecutive inner steps, so its re-DMA is elided.
        grid=(n_col, n_row),
        in_specs=[
            pl.BlockSpec((tb, tc), lambda j, i: (i, j)),   # x tile
            pl.BlockSpec((1, tc), lambda j, i: (0, j)),    # pe slice (held across batch)
        ],
        out_specs=pl.BlockSpec((tb, tc), lambda j, i: (i, j)),
        compiler_params=pltpu.CompilerParams(
            dimension_semantics=("parallel", "parallel"),
            vmem_limit_bytes=vmem_limit,
        ),
    )(x2, pe_row)

    return out2.reshape(B, S, D)


def positional_encoding_forward(x: jnp.ndarray, pe_full: jnp.ndarray,
                                *, force_pallas: bool = False) -> jnp.ndarray:
    """Convenience wrapper: x: (B, S, D); pe_full: (max_len, D)."""
    B, S, D = x.shape
    pe_row = prepare_pe_rows(pe_full, S, D, x.dtype)
    return positional_encoding_forward_prepared(x, pe_row, force_pallas=force_pallas)


if __name__ == "__main__":
    # Small shapes consistent with the module: batch=2, seq=8, d_model=32.
    B, S, D = 2, 8, 32
    MAX_LEN = 64

    key = jax.random.PRNGKey(0)
    x = jax.random.normal(key, (B, S, D), dtype=jnp.float32)

    pe_full = _build_pe_table(D, MAX_LEN)

    # Force the Pallas path so the kernel itself is exercised at this tiny size
    # (production callers at this size would take the XLA fallback).
    out = positional_encoding_forward(x, pe_full, force_pallas=True)
    out = jax.block_until_ready(out)

    # Sanity check against the pure-JAX reference.
    ref = x + pe_full[None, :S, :]
    assert out.shape == (B, S, D)
    assert jnp.allclose(out, ref, atol=1e-6), "mismatch vs reference"

    print("KERNEL_OK")
</pallas_src>

<mosaic_0001>
module attributes {stable_mosaic.version = 11 : i64} {
  func.func @_add_pe_kernel(%arg0: i32, %arg1: i32, %arg2: memref<2x256xf32, #tpu.memory_space<vmem>>, %arg3: memref<1x256xf32, #tpu.memory_space<vmem>>, %arg4: memref<2x256xf32, #tpu.memory_space<vmem>>) attributes {dimension_semantics = [#tpu.dimension_semantics<parallel>, #tpu.dimension_semantics<parallel>], iteration_bounds = array<i64: 1, 1>, scalar_prefetch = 0 : i64, scratch_operands = 0 : i64, tpu.core_type = #tpu.core_type<tc>, window_params = [{transform_indices = @transform_0, window_bounds = array<i64: 2, 256>}, {transform_indices = @transform_1, window_bounds = array<i64: 1, 256>}, {transform_indices = @transform_2, window_bounds = array<i64: 2, 256>}]} {
    %c0 = arith.constant 0 : index
    %c0_0 = arith.constant 0 : index
    %0 = vector.load %arg2[%c0, %c0_0] : memref<2x256xf32, #tpu.memory_space<vmem>>, vector<2x256xf32>
    %c0_1 = arith.constant 0 : index
    %c0_2 = arith.constant 0 : index
    %1 = vector.load %arg3[%c0_1, %c0_2] : memref<1x256xf32, #tpu.memory_space<vmem>>, vector<1x256xf32>
    %2 = vector.broadcast %1 : vector<1x256xf32> to vector<2x256xf32>
    %3 = arith.addf %0, %2 : vector<2x256xf32>
    %c0_3 = arith.constant 0 : index
    %c0_4 = arith.constant 0 : index
    %4 = vector.load %arg4[%c0_3, %c0_4] : memref<2x256xf32, #tpu.memory_space<vmem>>, vector<2x256xf32>
    tpu.vector_store %arg4[%c0_3, %c0_4], %3 {strides = array<i32>} : memref<2x256xf32, #tpu.memory_space<vmem>>, vector<2x256xf32>,
    return
  }
  func.func @transform_0(%arg0: i32, %arg1: i32) -> (i32, i32) {
    %c0_i32 = arith.constant 0 : i32
    return %arg1, %arg0 : i32, i32
  }
  func.func @transform_1(%arg0: i32, %arg1: i32) -> (i32, i32) {
    %c0_i32 = arith.constant 0 : i32
    %c0_i32_0 = arith.constant 0 : i32
    return %c0_i32, %arg0 : i32, i32
  }
  func.func @transform_2(%arg0: i32, %arg1: i32) -> (i32, i32) {
    %c0_i32 = arith.constant 0 : i32
    return %arg1, %arg0 : i32, i32
  }
}

</mosaic_0001>

<llo_original>
// kernel: tpu_custom_call.1
$region0: #{tpu_custom_call.1}
  #allocation0 [shape = 'u32[]', space=smem, size = 0x4, offset = 0x4, fixed_abs, tag = 'smem constant byte address 0x4 - core index']
  #allocation1 [shape = 'u32[144,128]{1,0:T(1,128)}', space=vmem, size = 0x12000, scoped, tag = 'internal scratch']
  %s0 = inlined_call_operand.hbm [shape: f32[2,256], index: 0, kind: input, shape index: {}]
  %s1 = inlined_call_operand.vmem [shape: f32[1,256], index: 1, kind: input, shape index: {}]
  %s2 = inlined_call_operand.hbm [shape: f32[2,256], index: 2, kind: output, shape index: {}]
  %s3 = sld [smem:[#allocation0]]
  $region22: #{tpu_custom_call.1} parent=0
    _
  %s5 = ssub.s32 1, %s3
  %s6 = scalar_select 0, %s5, %s3
  $region1: #{tpu_custom_call.1} parent=0
    #allocation2 [shape = 'u8[2048]{0}', space=vmem, size = 0x800, scoped, tag = 'input window, operand 0, single buffered']
    #allocation3 [shape = 's32[1]{0}', space=sflag, size = 0x4, scoped, tag = 'scoped memory for tpu_custom_call.1']
    #allocation4 [shape = 's32[1]{0}', space=sflag, size = 0x4, scoped, tag = 'scoped memory for tpu_custom_call.1']
    #allocation5 [shape = 'u8[2048]{0}', space=vmem, size = 0x800, scoped, tag = 'output window, operand 0, single buffered']
    %7 = vsyncpa [#allocation3], 0
    %8 = vsyncpa [#allocation4], 0
    // Predicated region
    $region2: #{tpu_custom_call.1} parent=1 // pred_check
      _
    $region3: #{tpu_custom_call.1} parent=1 // pred_check_branch
      %10 = sbr.rel (0) target = $region5
    $region4: #{tpu_custom_call.1} parent=1 // pred_region
      %s12 = ssub.s32 64, 64
      %13 = vsyncadd [#allocation3], %s12
      %s15 = sshll.u32 [#allocation2], 4
      %s16 = int_to_ptr.vmem [resolvable:$true] %s15
      %18 = dma.hbm_to_vmem [thread:$0]  %s0, 64, %s16, [#allocation3]
    $region5: #{tpu_custom_call.1} parent=1 // pred_fallthru
      _
    // Predicated region
    $region6: #{tpu_custom_call.1} parent=1 // pred_check
      _
    $region7: #{tpu_custom_call.1} parent=1 // pred_check_branch
      %20 = sbr.rel (0) target = $region9
    $region8: #{tpu_custom_call.1} parent=1 // pred_region
      _
    $region9: #{tpu_custom_call.1} parent=1 // pred_fallthru
      _
    // Predicated region
    $region10: #{tpu_custom_call.1} parent=1 // pred_check
      _
    $region11: #{tpu_custom_call.1} parent=1 // pred_check_branch
      %22 = sbr.rel (0) target = $region13
    $region12: #{tpu_custom_call.1} parent=1 // pred_region
      %23 = dma.done [#allocation3], 64
    $region13: #{tpu_custom_call.1} parent=1 // pred_fallthru
      _
    %v24 = vld [vmem:[#allocation2] sm:$0xf]
    %v25 = vld [vmem:[%s1] sm:$0x3]
    %v27 = vlaneseq
    %v28 = vshrl.u32 %v27, 7
    %v29 = vsub.s32 0, %v28
    %v30 = vrot.slane %v25, %v29
    %v31 = vlaneseq
    %v32 = vshrl.u32 %v31, 7
    %v33 = vsub.s32 1, %v32
    %v34 = vrot.slane %v25, %v33
    %v35 = vcombine.low %v30, %v34
    %v37 = vunpack.c.l.s4 1983009808
    %v38 = vunpack.c.0.s8 %v37
    %v39 = vlaneseq
    %v40 = vshrl.u32 %v39, 7
    %v41 = vsub.s32 %v38, %v40
    %v42 = vrot.slane %v35, %v41
    %v44 = vadd.f32 %v24, %v42
    %45 = vst [vmem:[#allocation5] sm:$0xf] %v44
    // Predicated region
    $region14: #{tpu_custom_call.1} parent=1 // pred_check
      _
    $region15: #{tpu_custom_call.1} parent=1 // pred_check_branch
      %47 = sbr.rel (0) target = $region17
    $region16: #{tpu_custom_call.1} parent=1 // pred_region
      %s49 = ssub.s32 64, 64
      %50 = vsyncadd [#allocation4], %s49
      %s52 = sshll.u32 [#allocation5], 4
      %s53 = int_to_ptr.vmem [resolvable:$true] %s52
      %55 = dma.vmem_to_hbm [thread:$0]  %s53, 64, %s2, [#allocation4]
    $region17: #{tpu_custom_call.1} parent=1 // pred_fallthru
      _
    // Predicated region
    $region18: #{tpu_custom_call.1} parent=1 // pred_check
      _
    $region19: #{tpu_custom_call.1} parent=1 // pred_check_branch
      %57 = sbr.rel (0) target = $region21
    $region20: #{tpu_custom_call.1} parent=1 // pred_region
      %58 = dma.done [#allocation4], 64
    $region21: #{tpu_custom_call.1} parent=1 // pred_fallthru
      _
    %59 = vsyncpa [#allocation3], 1
    %60 = vsyncpa [#allocation4], 1

</llo_original>
